<compile_context>
chip_gen: v7x
topology: tpu7x:2x2x1
jax: 0.10.0
libtpu: 0.0.40
codegen_flags: <defaults>
</compile_context>

<pallas_src>
import math

import jax
import jax.numpy as jnp
from jax.experimental import pallas as pl
from jax.experimental.pallas import tpu as pltpu


# Largest row count that still runs as a single grid step (one DMA + one
# compute pass, no per-step pipeline overhead).
_SINGLE_STEP_MAX_ROWS = 1024


def _policy_kernel(action_std, h1_dim, h2_dim, a_dim):
    """Kernel body; action_std and layer widths baked in as compile-time consts."""

    def kernel(s_ref, w1_ref, w2_ref, w3_ref, b_ref, noise_ref, mean_ref, act_ref):
        # Packed biases (f32); slice out the per-layer rows.
        b_all = b_ref[...]                      # (3, BW)
        b1 = b_all[0:1, :h1_dim]                # (1, h1_dim)
        b2 = b_all[1:2, :h2_dim]                # (1, h2_dim)
        b3 = b_all[2:3, :a_dim]                 # (1, a_dim)

        # ---- MLP hot path: bf16 operands into the MXU, f32 accumulation ----
        x = s_ref[...].astype(jnp.bfloat16)
        h1 = jnp.dot(x, w1_ref[...], preferred_element_type=jnp.float32)
        h1 = jnp.maximum(h1 + b1, 0.0)                                # ReLU (f32)

        h2 = jnp.dot(h1.astype(jnp.bfloat16), w2_ref[...],
                     preferred_element_type=jnp.float32)
        h2 = jnp.maximum(h2 + b2, 0.0)                                # ReLU (f32)

        m = jnp.dot(h2.astype(jnp.bfloat16), w3_ref[...],
                    preferred_element_type=jnp.float32)
        m = m + b3                                                    # (TB, a_dim)

        # ---- column squash: col 0 -> sigmoid, col 1 -> tanh, rest untouched ----
        cols = jax.lax.broadcasted_iota(jnp.int32, m.shape, 1)
        m = jnp.where(cols == 0, jax.nn.sigmoid(m),
                      jnp.where(cols == 1, jnp.tanh(m), m))

        # ---- reparameterized sample from N(mean, action_std^2 * I) ----
        # One full-ref store per output (no partial/strided writes).
        mean_ref[...] = m.astype(mean_ref.dtype)
        act_ref[...] = (m + action_std * noise_ref[...]).astype(act_ref.dtype)

    return kernel


def prepare_params(params):
    """One-time conversion of f32 Linear params into kernel layout.

    Returns (w1_bf16, w2_bf16, w3_bf16, packed_biases_f32).  Call ONCE outside
    the per-step forward so the hot path has zero casting/packing work.
    """
    w1, b1, w2, b2, w3, b3 = params
    h1_dim, h2_dim, a_dim = w1.shape[1], w2.shape[1], w3.shape[1]
    bw = max(h1_dim, h2_dim, a_dim)
    b_all = jnp.zeros((3, bw), jnp.float32)
    b_all = b_all.at[0, :h1_dim].set(jnp.asarray(b1, jnp.float32).reshape(-1))
    b_all = b_all.at[1, :h2_dim].set(jnp.asarray(b2, jnp.float32).reshape(-1))
    b_all = b_all.at[2, :a_dim].set(jnp.asarray(b3, jnp.float32).reshape(-1))
    return (w1.astype(jnp.bfloat16), w2.astype(jnp.bfloat16),
            w3.astype(jnp.bfloat16), b_all)


def gaussian_policy_forward(s, prepared, noise, action_std, tile_b=2048):
    """Runs the Pallas kernel. Returns (action, (action_mean, cov_mat))."""
    w1b, w2b, w3b, b_all = prepared
    B, s_dim = s.shape
    h1_dim = w1b.shape[1]
    h2_dim = w2b.shape[1]
    a_dim = w3b.shape[1]

    # Batch tiling:
    #   * small B  -> one sublane-aligned tile, grid=(1,)  (no pipeline overhead)
    #   * large B  -> tile_b-row tiles, ragged last block handled by Pallas
    # No wrapper-side padding, no post-kernel slicing.
    rows8 = max(8, pl.cdiv(B, 8) * 8)
    tb = rows8 if rows8 <= min(_SINGLE_STEP_MAX_ROWS, tile_b) else tile_b
    grid = (pl.cdiv(B, tb),)

    resident = lambda arr: pl.BlockSpec(arr.shape, lambda i: (0, 0))  # DMA once

    kernel = _policy_kernel(float(action_std), h1_dim, h2_dim, a_dim)
    mean, action = pl.pallas_call(
        kernel,
        out_shape=(jax.ShapeDtypeStruct((B, a_dim), jnp.float32),
                   jax.ShapeDtypeStruct((B, a_dim), jnp.float32)),
        grid=grid,
        in_specs=[
            pl.BlockSpec((tb, s_dim), lambda i: (i, 0)),     # s: tiled over batch
            resident(w1b), resident(w2b), resident(w3b),      # weights resident in VMEM
            resident(b_all),                                   # packed biases resident
            pl.BlockSpec((tb, a_dim), lambda i: (i, 0)),      # noise: tiled over batch
        ],
        out_specs=(pl.BlockSpec((tb, a_dim), lambda i: (i, 0)),
                   pl.BlockSpec((tb, a_dim), lambda i: (i, 0))),
        compiler_params=pltpu.CompilerParams(
            dimension_semantics=("parallel",)),   # megacore on v7x when grid >= 2
    )(s, w1b, w2b, w3b, b_all, noise)

    # Constant-folded under jit (pure function of action_std and a_dim).
    cov_mat = (action_std * action_std) * jnp.eye(a_dim, dtype=jnp.float32)
    return action, (mean, cov_mat)


def init_params(key, s_dim, a_dim, hidden_units=(128, 64)):
    """Deterministic init mimicking torch.nn.Linear default (U[-1/sqrt(fan_in), ..])."""
    dims = [s_dim, hidden_units[0], hidden_units[1], a_dim]
    params = []
    for i in range(3):
        key, kw, kb = jax.random.split(key, 3)
        fan_in, fan_out = dims[i], dims[i + 1]
        bound = 1.0 / math.sqrt(fan_in)
        w = jax.random.uniform(kw, (fan_in, fan_out), jnp.float32, -bound, bound)
        b = jax.random.uniform(kb, (1, fan_out), jnp.float32, -bound, bound)
        params += [w, b]
    return tuple(params)


if __name__ == "__main__":
    key = jax.random.PRNGKey(0)

    # Small shapes: one single-step grid with a ragged (non-multiple-of-8) batch.
    B, s_dim, a_dim = 20, 16, 4
    ACTION_STD = 0.5

    k_params, k_state, k_noise = jax.random.split(key, 3)
    params = init_params(k_params, s_dim, a_dim)
    prepared = prepare_params(params)          # one-time: bf16 weights + packed biases
    s = jax.random.normal(k_state, (B, s_dim), dtype=jnp.float32)
    noise = jax.random.normal(k_noise, (B, a_dim), dtype=jnp.float32)

    fwd = jax.jit(lambda s_, p_, n_: gaussian_policy_forward(s_, p_, n_, ACTION_STD))
    action, (action_mean, cov_mat) = fwd(s, prepared, noise)
    jax.block_until_ready(action)
    jax.block_until_ready(action_mean)

    # Pure-JAX reference with the same bf16-weight / f32-accumulation semantics.
    w1, b1, w2, b2, w3, b3 = params
    w1b, w2b, w3b = (w.astype(jnp.bfloat16) for w in (w1, w2, w3))
    h1 = jnp.maximum(jnp.dot(s.astype(jnp.bfloat16), w1b,
                             preferred_element_type=jnp.float32) + b1, 0.0)
    h2 = jnp.maximum(jnp.dot(h1.astype(jnp.bfloat16), w2b,
                             preferred_element_type=jnp.float32) + b2, 0.0)
    m_ref = jnp.dot(h2.astype(jnp.bfloat16), w3b,
                    preferred_element_type=jnp.float32) + b3
    m_ref = m_ref.at[:, 0].set(jax.nn.sigmoid(m_ref[:, 0]))
    m_ref = m_ref.at[:, 1].set(jnp.tanh(m_ref[:, 1]))
    act_ref = m_ref + ACTION_STD * noise

    assert action_mean.shape == (B, a_dim) and action.shape == (B, a_dim)
    assert jnp.allclose(action_mean, m_ref, atol=2e-3), "mean mismatch"
    assert jnp.allclose(action, act_ref, atol=2e-3), "sample mismatch"
    assert jnp.allclose(cov_mat, jnp.diag(jnp.full((a_dim,), ACTION_STD ** 2))), "cov mismatch"

    print("KERNEL_OK")
</pallas_src>

<mosaic_0001>
module attributes {stable_mosaic.version = 11 : i64} {
  func.func @kernel(%arg0: i32, %arg1: memref<24x16xf32, #tpu.memory_space<vmem>>, %arg2: memref<16x128xbf16, #tpu.memory_space<vmem>>, %arg3: memref<128x64xbf16, #tpu.memory_space<vmem>>, %arg4: memref<64x4xbf16, #tpu.memory_space<vmem>>, %arg5: memref<3x128xf32, #tpu.memory_space<vmem>>, %arg6: memref<24x4xf32, #tpu.memory_space<vmem>>, %arg7: memref<24x4xf32, #tpu.memory_space<vmem>>, %arg8: memref<24x4xf32, #tpu.memory_space<vmem>>) attributes {dimension_semantics = [#tpu.dimension_semantics<parallel>], iteration_bounds = array<i64: 1>, scalar_prefetch = 0 : i64, scratch_operands = 0 : i64, tpu.core_type = #tpu.core_type<tc>, window_params = [{transform_indices = @transform_0, window_bounds = array<i64: 24, 16>}, {pipeline_mode = #tpu.pipeline_mode<synchronous>, transform_indices = @transform_1, window_bounds = array<i64: 16, 128>}, {pipeline_mode = #tpu.pipeline_mode<synchronous>, transform_indices = @transform_2, window_bounds = array<i64: 128, 64>}, {pipeline_mode = #tpu.pipeline_mode<synchronous>, transform_indices = @transform_3, window_bounds = array<i64: 64, 4>}, {pipeline_mode = #tpu.pipeline_mode<synchronous>, transform_indices = @transform_4, window_bounds = array<i64: 3, 128>}, {transform_indices = @transform_5, window_bounds = array<i64: 24, 4>}, {transform_indices = @transform_6, window_bounds = array<i64: 24, 4>}, {transform_indices = @transform_7, window_bounds = array<i64: 24, 4>}]} {
    %c0 = arith.constant 0 : index
    %c0_0 = arith.constant 0 : index
    %0 = vector.load %arg5[%c0, %c0_0] : memref<3x128xf32, #tpu.memory_space<vmem>>, vector<3x128xf32>
    %1 = vector.extract_strided_slice %0 {offsets = [0, 0], sizes = [1, 128], strides = [1, 1]} : vector<3x128xf32> to vector<1x128xf32>
    %2 = vector.extract_strided_slice %0 {offsets = [1, 0], sizes = [1, 64], strides = [1, 1]} : vector<3x128xf32> to vector<1x64xf32>
    %3 = vector.extract_strided_slice %0 {offsets = [2, 0], sizes = [1, 4], strides = [1, 1]} : vector<3x128xf32> to vector<1x4xf32>
    %c0_1 = arith.constant 0 : index
    %c0_2 = arith.constant 0 : index
    %4 = vector.load %arg1[%c0_1, %c0_2] : memref<24x16xf32, #tpu.memory_space<vmem>>, vector<24x16xf32>
    %5 = arith.truncf %4 : vector<24x16xf32> to vector<24x16xbf16>
    %c0_3 = arith.constant 0 : index
    %c0_4 = arith.constant 0 : index
    %6 = vector.load %arg2[%c0_3, %c0_4] : memref<16x128xbf16, #tpu.memory_space<vmem>>, vector<16x128xbf16>
    %cst = arith.constant dense<0.000000e+00> : vector<24x128xf32>
    %7 = tpu.matmul %5, %6, %cst {dimension_numbers = #tpu.dot_dimension_numbers<[1], [0], [0], [1], [0, 0, 1, 1], [], []>} : vector<24x16xbf16>, vector<16x128xbf16>, vector<24x128xf32> -> vector<24x128xf32>
    %8 = vector.broadcast %1 : vector<1x128xf32> to vector<24x128xf32>
    %9 = arith.addf %7, %8 : vector<24x128xf32>
    %cst_5 = arith.constant 0.000000e+00 : f32
    %10 = vector.broadcast %cst_5 : f32 to vector<24x128xf32>
    %11 = arith.maximumf %9, %10 : vector<24x128xf32>
    %12 = arith.truncf %11 : vector<24x128xf32> to vector<24x128xbf16>
    %c0_6 = arith.constant 0 : index
    %c0_7 = arith.constant 0 : index
    %13 = vector.load %arg3[%c0_6, %c0_7] : memref<128x64xbf16, #tpu.memory_space<vmem>>, vector<128x64xbf16>
    %cst_8 = arith.constant dense<0.000000e+00> : vector<24x64xf32>
    %14 = tpu.matmul %12, %13, %cst_8 {dimension_numbers = #tpu.dot_dimension_numbers<[1], [0], [0], [1], [0, 0, 1, 1], [], []>} : vector<24x128xbf16>, vector<128x64xbf16>, vector<24x64xf32> -> vector<24x64xf32>
    %15 = vector.broadcast %2 : vector<1x64xf32> to vector<24x64xf32>
    %16 = arith.addf %14, %15 : vector<24x64xf32>
    %cst_9 = arith.constant 0.000000e+00 : f32
    %17 = vector.broadcast %cst_9 : f32 to vector<24x64xf32>
    %18 = arith.maximumf %16, %17 : vector<24x64xf32>
    %19 = arith.truncf %18 : vector<24x64xf32> to vector<24x64xbf16>
    %c0_10 = arith.constant 0 : index
    %c0_11 = arith.constant 0 : index
    %20 = vector.load %arg4[%c0_10, %c0_11] : memref<64x4xbf16, #tpu.memory_space<vmem>>, vector<64x4xbf16>
    %cst_12 = arith.constant dense<0.000000e+00> : vector<24x4xf32>
    %21 = tpu.matmul %19, %20, %cst_12 {dimension_numbers = #tpu.dot_dimension_numbers<[1], [0], [0], [1], [0, 0, 1, 1], [], []>} : vector<24x64xbf16>, vector<64x4xbf16>, vector<24x4xf32> -> vector<24x4xf32>
    %22 = vector.broadcast %3 : vector<1x4xf32> to vector<24x4xf32>
    %23 = arith.addf %21, %22 : vector<24x4xf32>
    %24 = tpu.iota {dimensions = array<i32: 1>} : vector<24x4xi32>
    %c0_i32 = arith.constant 0 : i32
    %25 = vector.broadcast %c0_i32 : i32 to vector<24x4xi32>
    %26 = arith.cmpi eq, %24, %25 : vector<24x4xi32>
    %27 = arith.negf %23 : vector<24x4xf32>
    %28 = math.exp %27 : vector<24x4xf32>
    %cst_13 = arith.constant 1.000000e+00 : f32
    %29 = vector.broadcast %cst_13 : f32 to vector<24x4xf32>
    %30 = arith.addf %29, %28 : vector<24x4xf32>
    %31 = arith.divf %29, %30 : vector<24x4xf32>
    %c1_i32 = arith.constant 1 : i32
    %32 = vector.broadcast %c1_i32 : i32 to vector<24x4xi32>
    %33 = arith.cmpi eq, %24, %32 : vector<24x4xi32>
    %34 = math.tanh %23 : vector<24x4xf32>
    %35 = arith.select %33, %34, %23 : vector<24x4xi1>, vector<24x4xf32>
    %36 = arith.select %26, %31, %35 : vector<24x4xi1>, vector<24x4xf32>
    %c0_14 = arith.constant 0 : index
    %c0_15 = arith.constant 0 : index
    %37 = vector.load %arg7[%c0_14, %c0_15] : memref<24x4xf32, #tpu.memory_space<vmem>>, vector<24x4xf32>
    tpu.vector_store %arg7[%c0_14, %c0_15], %36 {strides = array<i32>} : memref<24x4xf32, #tpu.memory_space<vmem>>, vector<24x4xf32>,
    %c0_16 = arith.constant 0 : index
    %c0_17 = arith.constant 0 : index
    %38 = vector.load %arg6[%c0_16, %c0_17] : memref<24x4xf32, #tpu.memory_space<vmem>>, vector<24x4xf32>
    %cst_18 = arith.constant 5.000000e-01 : f32
    %39 = vector.broadcast %cst_18 : f32 to vector<24x4xf32>
    %40 = arith.mulf %39, %38 : vector<24x4xf32>
    %41 = arith.addf %36, %40 : vector<24x4xf32>
    %c0_19 = arith.constant 0 : index
    %c0_20 = arith.constant 0 : index
    %42 = vector.load %arg8[%c0_19, %c0_20] : memref<24x4xf32, #tpu.memory_space<vmem>>, vector<24x4xf32>
    tpu.vector_store %arg8[%c0_19, %c0_20], %41 {strides = array<i32>} : memref<24x4xf32, #tpu.memory_space<vmem>>, vector<24x4xf32>,
    return
  }
  func.func @transform_0(%arg0: i32) -> (i32, i32) {
    %c0_i32 = arith.constant 0 : i32
    %c0_i32_0 = arith.constant 0 : i32
    return %arg0, %c0_i32 : i32, i32
  }
  func.func @transform_1(%arg0: i32) -> (i32, i32) {
    %c0_i32 = arith.constant 0 : i32
    %c0_i32_0 = arith.constant 0 : i32
    %c0_i32_1 = arith.constant 0 : i32
    return %c0_i32, %c0_i32_0 : i32, i32
  }
  func.func @transform_2(%arg0: i32) -> (i32, i32) {
    %c0_i32 = arith.constant 0 : i32
    %c0_i32_0 = arith.constant 0 : i32
    %c0_i32_1 = arith.constant 0 : i32
    return %c0_i32, %c0_i32_0 : i32, i32
  }
  func.func @transform_3(%arg0: i32) -> (i32, i32) {
    %c0_i32 = arith.constant 0 : i32
    %c0_i32_0 = arith.constant 0 : i32
    %c0_i32_1 = arith.constant 0 : i32
    return %c0_i32, %c0_i32_0 : i32, i32
  }
  func.func @transform_4(%arg0: i32) -> (i32, i32) {
    %c0_i32 = arith.constant 0 : i32
    %c0_i32_0 = arith.constant 0 : i32
    %c0_i32_1 = arith.constant 0 : i32
    return %c0_i32, %c0_i32_0 : i32, i32
  }
  func.func @transform_5(%arg0: i32) -> (i32, i32) {
    %c0_i32 = arith.constant 0 : i32
    %c0_i32_0 = arith.constant 0 : i32
    return %arg0, %c0_i32 : i32, i32
  }
  func.func @transform_6(%arg0: i32) -> (i32, i32) {
    %c0_i32 = arith.constant 0 : i32
    %c0_i32_0 = arith.constant 0 : i32
    return %arg0, %c0_i32 : i32, i32
  }
  func.func @transform_7(%arg0: i32) -> (i32, i32) {
    %c0_i32 = arith.constant 0 : i32
    %c0_i32_0 = arith.constant 0 : i32
    return %arg0, %c0_i32 : i32, i32
  }
}

</mosaic_0001>

<llo_original>
// kernel: _lambda_.1
$region0: #{_lambda_.1}
  #allocation0 [shape = 'u32[]', space=smem, size = 0x4, offset = 0x4, fixed_abs, tag = 'smem constant byte address 0x4 - core index']
  #allocation1 [shape = 'u32[144,128]{1,0:T(1,128)}', space=vmem, size = 0x12000, scoped, tag = 'internal scratch']
  %s0 = inlined_call_operand.vmem [shape: f32[20,16], index: 0, kind: input, shape index: {}]
  %s1 = inlined_call_operand.vmem [shape: bf16[16,128], index: 1, kind: input, shape index: {}]
  %s2 = inlined_call_operand.vmem [shape: bf16[128,64], index: 2, kind: input, shape index: {}]
  %s3 = inlined_call_operand.vmem [shape: bf16[64,4], index: 3, kind: input, shape index: {}]
  %s4 = inlined_call_operand.vmem [shape: f32[3,128], index: 4, kind: input, shape index: {}]
  %s5 = inlined_call_operand.vmem [shape: f32[20,4], index: 5, kind: input, shape index: {}]
  %s6 = inlined_call_operand.vmem [shape: f32[20,4], index: 6, kind: output, shape index: {0}]
  %s7 = inlined_call_operand.vmem [shape: f32[20,4], index: 7, kind: output, shape index: {1}]
  %8 = xla_tuple %s6, %s7
  %s9 = sld [smem:[#allocation0]]
  $region42: #{_lambda_.1} parent=0
    _
  %s11 = ssub.s32 1, %s9
  %s12 = scalar_select 0, %s11, %s9
  // Predicated region
  $region2: #{_lambda_.1} parent=0 // pred_check
    _
  $region3: #{_lambda_.1} parent=0 // pred_check_branch
    %14 = sbr.rel (0) target = $region5
  $region4: #{_lambda_.1} parent=0 // pred_region
    _
  $region5: #{_lambda_.1} parent=0 // pred_fallthru
    _
  // Predicated region
  $region6: #{_lambda_.1} parent=0 // pred_check
    _
  $region7: #{_lambda_.1} parent=0 // pred_check_branch
    %16 = sbr.rel (0) target = $region9
  $region8: #{_lambda_.1} parent=0 // pred_region
    _
  $region9: #{_lambda_.1} parent=0 // pred_fallthru
    _
  // Predicated region
  $region10: #{_lambda_.1} parent=0 // pred_check
    _
  $region11: #{_lambda_.1} parent=0 // pred_check_branch
    %18 = sbr.rel (0) target = $region13
  $region12: #{_lambda_.1} parent=0 // pred_region
    _
  $region13: #{_lambda_.1} parent=0 // pred_fallthru
    _
  // Predicated region
  $region14: #{_lambda_.1} parent=0 // pred_check
    _
  $region15: #{_lambda_.1} parent=0 // pred_check_branch
    %20 = sbr.rel (0) target = $region17
  $region16: #{_lambda_.1} parent=0 // pred_region
    _
  $region17: #{_lambda_.1} parent=0 // pred_fallthru
    _
  // Predicated region
  $region18: #{_lambda_.1} parent=0 // pred_check
    _
  $region19: #{_lambda_.1} parent=0 // pred_check_branch
    %22 = sbr.rel (0) target = $region21
  $region20: #{_lambda_.1} parent=0 // pred_region
    _
  $region21: #{_lambda_.1} parent=0 // pred_fallthru
    _
  // Predicated region
  $region22: #{_lambda_.1} parent=0 // pred_check
    _
  $region23: #{_lambda_.1} parent=0 // pred_check_branch
    %24 = sbr.rel (0) target = $region25
  $region24: #{_lambda_.1} parent=0 // pred_region
    _
  $region25: #{_lambda_.1} parent=0 // pred_fallthru
    _
  %v26 = vld [vmem:[%s4] sm:$0x7]
  %v27 = vld [vmem:[%s0] sm:$0xff]
  %v28 = vld [vmem:[%s0 + $0x8] sm:$0xff]
  %v29 = vld [vmem:[%s0 + $0x10] sm:$0xff]
  %v30 = vpack.c.bf16 %v28, %v27
  %v31 = vpack.c.bf16 %v29, %v29
  %v32 = vld [vmem:[%s1] sm:$0xf]
  %v33 = vld [vmem:[%s1 + $0x4] sm:$0xf]
  %v34 = vlaneseq
  %v35 = vshrl.u32 %v34, 7
  %v36 = vsub.s32 0, %v35
  %v37 = vrot.slane %v26, %v36
  %v40 = vunpack.c.l.b16 %v32
  %v41 = vunpack.c.l.b16 %v33
  %v42 = vpack.c.b16 %v41, %v40
  %vm44 = vcmask 130048
  %v46 = vsel %vm44, %v30, 0
  %v49 = vsel %vm44, %v31, 0
  %51 = vmatprep.subr.bf16.mxu0 0
  %52 = vmatpush1.bf16.msra.mxu0 %v42
  %53 = vmatprep.subr.bf16.mxu0 0
  %54 = vmatpush1.bf16.msra.mxu0 0
  %55 = vmatprep.subr.bf16.mxu0 0
  %56 = vmatpush1.bf16.msra.mxu0 0
  %57 = vmatprep.subr.bf16.mxu0 0
  %58 = vmatpush1.bf16.msra.mxu0 0
  %59 = vmatprep.subr.bf16.mxu0 0
  %60 = vmatpush1.bf16.msra.mxu0 0
  %61 = vmatprep.subr.bf16.mxu0 0
  %62 = vmatpush1.bf16.msra.mxu0 0
  %63 = vmatprep.subr.bf16.mxu0 0
  %64 = vmatpush1.bf16.msra.mxu0 0
  %65 = vmatprep.subr.bf16.mxu0 0
  %66 = vmatpush1.bf16.msra.mxu0 0
  %67 = vmatprep.subr.bf16.mxu0 0
  %68 = vmatpush1.bf16.msra.mxu0 0
  %69 = vmatprep.subr.bf16.mxu0 0
  %70 = vmatpush1.bf16.msra.mxu0 0
  %71 = vmatprep.subr.bf16.mxu0 0
  %72 = vmatpush1.bf16.msra.mxu0 0
  %73 = vmatprep.subr.bf16.mxu0 0
  %74 = vmatpush1.bf16.msra.mxu0 0
  %75 = vmatprep.subr.bf16.mxu0 0
  %76 = vmatpush1.bf16.msra.mxu0 0
  %77 = vmatprep.subr.bf16.mxu0 0
  %78 = vmatpush1.bf16.msra.mxu0 0
  %79 = vmatprep.subr.bf16.mxu0 0
  %80 = vmatpush1.bf16.msra.mxu0 0
  %81 = vmatprep.subr.bf16.mxu0 0
  %82 = vmatpush1.bf16.msra.mxu0 0
  %83 = vmatprep.mubr.bf16.mxu0 0
  %84 = vmatmul.mubr.bf16.gmra.mrb[0].mxu0 %v46
  %v85 = vpop.f32.mrb[0].mxu0
  %v86 = vadd.f32 %v37, %v85
  %v87 = vpop.f32.mrb[0].mxu0
  %v88 = vpop.f32.mrb[0].mxu0
  %v89 = vadd.f32 %v37, %v88
  %v90 = vpop.f32.mrb[0].mxu0
  %91 = vmatprep.mubr.bf16.mxu0 0
  %92 = vmatmul.mubr.bf16.gmra.mrb[0].mxu0 %v49
  %v93 = vpop.f32.mrb[0].mxu0
  %v94 = vadd.f32 %v37, %v93
  %v95 = vpop.f32.mrb[0].mxu0
  %v96 = vpop.f32.mrb[0].mxu0
  %v97 = vpop.f32.mrb[0].mxu0
  %98 = vdwg.mxu0
  %v99 = vmax.f32 %v86, 0.0
  %v100 = vmax.f32 %v89, 0.0
  %v101 = vmax.f32 %v94, 0.0
  %v102 = vpack.c.bf16 %v100, %v99
  %v103 = vpack.c.bf16 %v101, %v101
  %v104 = vld [vmem:[%s2] sm:$0xf]
  %v105 = vld [vmem:[%s2 + $0x4] sm:$0xf]
  %v106 = vld [vmem:[%s2 + $0x8] sm:$0xf]
  %v107 = vld [vmem:[%s2 + $0xc] sm:$0xf]
  %v108 = vld [vmem:[%s2 + $0x10] sm:$0xf]
  %v109 = vld [vmem:[%s2 + $0x14] sm:$0xf]
  %v110 = vld [vmem:[%s2 + $0x18] sm:$0xf]
  %v111 = vld [vmem:[%s2 + $0x1c] sm:$0xf]
  %v112 = vld [vmem:[%s2 + $0x20] sm:$0xf]
  %v113 = vld [vmem:[%s2 + $0x24] sm:$0xf]
  %v114 = vld [vmem:[%s2 + $0x28] sm:$0xf]
  %v115 = vld [vmem:[%s2 + $0x2c] sm:$0xf]
  %v116 = vld [vmem:[%s2 + $0x30] sm:$0xf]
  %v117 = vld [vmem:[%s2 + $0x34] sm:$0xf]
  %v118 = vld [vmem:[%s2 + $0x38] sm:$0xf]
  %v119 = vld [vmem:[%s2 + $0x3c] sm:$0xf]
  %v120 = vlaneseq
  %v121 = vshrl.u32 %v120, 7
  %v122 = vsub.s32 1, %v121
  %v123 = vrot.slane %v26, %v122
  %v140 = vunpack.c.l.b16 %v104
  %v141 = vunpack.c.l.b16 %v105
  %v142 = vunpack.c.l.b16 %v106
  %v143 = vunpack.c.l.b16 %v107
  %v144 = vunpack.c.l.b16 %v108
  %v145 = vunpack.c.l.b16 %v109
  %v146 = vunpack.c.l.b16 %v110
  %v147 = vunpack.c.l.b16 %v111
  %v148 = vunpack.c.l.b16 %v112
  %v149 = vunpack.c.l.b16 %v113
  %v150 = vunpack.c.l.b16 %v114
  %v151 = vunpack.c.l.b16 %v115
  %v152 = vunpack.c.l.b16 %v116
  %v153 = vunpack.c.l.b16 %v117
  %v154 = vunpack.c.l.b16 %v118
  %v155 = vunpack.c.l.b16 %v119
  %v156 = vpack.c.b16 %v141, %v140
  %v157 = vpack.c.b16 %v143, %v142
  %v158 = vpack.c.b16 %v145, %v144
  %v159 = vpack.c.b16 %v147, %v146
  %v160 = vpack.c.b16 %v149, %v148
  %v161 = vpack.c.b16 %v151, %v150
  %v162 = vpack.c.b16 %v153, %v152
  %v163 = vpack.c.b16 %v155, %v154
  %172 = vmatprep.subr.bf16.mxu0 0
  %173 = vmatpush1.bf16.msra.mxu0 %v156
  %174 = vmatprep.subr.bf16.mxu0 0
  %175 = vmatpush1.bf16.msra.mxu0 %v157
  %176 = vmatprep.subr.bf16.mxu0 0
  %177 = vmatpush1.bf16.msra.mxu0 %v158
  %178 = vmatprep.subr.bf16.mxu0 0
  %179 = vmatpush1.bf16.msra.mxu0 %v159
  %180 = vmatprep.subr.bf16.mxu0 0
  %181 = vmatpush1.bf16.msra.mxu0 %v160
  %182 = vmatprep.subr.bf16.mxu0 0
  %183 = vmatpush1.bf16.msra.mxu0 %v161
  %184 = vmatprep.subr.bf16.mxu0 0
  %185 = vmatpush1.bf16.msra.mxu0 %v162
  %186 = vmatprep.subr.bf16.mxu0 0
  %187 = vmatpush1.bf16.msra.mxu0 %v163
  %188 = vmatprep.subr.bf16.mxu0 0
  %189 = vmatpush1.bf16.msra.mxu0 0
  %190 = vmatprep.subr.bf16.mxu0 0
  %191 = vmatpush1.bf16.msra.mxu0 0
  %192 = vmatprep.subr.bf16.mxu0 0
  %193 = vmatpush1.bf16.msra.mxu0 0
  %194 = vmatprep.subr.bf16.mxu0 0
  %195 = vmatpush1.bf16.msra.mxu0 0
  %196 = vmatprep.subr.bf16.mxu0 0
  %197 = vmatpush1.bf16.msra.mxu0 0
  %198 = vmatprep.subr.bf16.mxu0 0
  %199 = vmatpush1.bf16.msra.mxu0 0
  %200 = vmatprep.subr.bf16.mxu0 0
  %201 = vmatpush1.bf16.msra.mxu0 0
  %202 = vmatprep.subr.bf16.mxu0 0
  %203 = vmatpush1.bf16.msra.mxu0 0
  %204 = vmatprep.mubr.bf16.mxu0 0
  %205 = vmatmul.mubr.bf16.gmra.mrb[0].mxu0 %v102
  %v206 = vpop.f32.mrb[0].mxu0
  %v207 = vadd.f32 %v123, %v206
  %v208 = vpop.f32.mrb[0].mxu0
  %v209 = vpop.f32.mrb[0].mxu0
  %v210 = vadd.f32 %v123, %v209
  %v211 = vpop.f32.mrb[0].mxu0
  %212 = vmatprep.mubr.bf16.mxu0 0
  %213 = vmatmul.mubr.bf16.gmra.mrb[0].mxu0 %v103
  %v214 = vpop.f32.mrb[0].mxu0
  %v215 = vadd.f32 %v123, %v214
  %v216 = vpop.f32.mrb[0].mxu0
  %v217 = vpop.f32.mrb[0].mxu0
  %v218 = vpop.f32.mrb[0].mxu0
  %219 = vdwg.mxu0
  %v220 = vmax.f32 %v207, 0.0
  %v221 = vmax.f32 %v210, 0.0
  %v222 = vmax.f32 %v215, 0.0
  %v223 = vpack.c.bf16 %v221, %v220
  %v224 = vpack.c.bf16 %v222, %v222
  %v225 = vld [vmem:[%s3] sm:$0xf]
  %v226 = vld [vmem:[%s3 + $0x4] sm:$0xf]
  %v227 = vld [vmem:[%s3 + $0x8] sm:$0xf]
  %v228 = vld [vmem:[%s3 + $0xc] sm:$0xf]
  %v229 = vld [vmem:[%s3 + $0x10] sm:$0xf]
  %v230 = vld [vmem:[%s3 + $0x14] sm:$0xf]
  %v231 = vld [vmem:[%s3 + $0x18] sm:$0xf]
  %v232 = vld [vmem:[%s3 + $0x1c] sm:$0xf]
  %v233 = vlaneseq
  %v234 = vshrl.u32 %v233, 7
  %v235 = vsub.s32 2, %v234
  %v236 = vrot.slane %v26, %v235
  %v245 = vunpack.c.l.b16 %v225
  %v246 = vunpack.c.l.b16 %v226
  %v247 = vunpack.c.l.b16 %v227
  %v248 = vunpack.c.l.b16 %v228
  %v249 = vunpack.c.l.b16 %v229
  %v250 = vunpack.c.l.b16 %v230
  %v251 = vunpack.c.l.b16 %v231
  %v252 = vunpack.c.l.b16 %v232
  %v253 = vpack.c.b16 %v246, %v245
  %v254 = vpack.c.b16 %v248, %v247
  %v255 = vpack.c.b16 %v250, %v249
  %v256 = vpack.c.b16 %v252, %v251
  %vm261 = vcmask 523264
  %v263 = vsel %vm261, %v223, 0
  %v266 = vsel %vm261, %v224, 0
  %268 = vmatprep.subr.bf16.mxu0 0
  %269 = vmatpush1.bf16.msra.mxu0 %v253
  %270 = vmatprep.subr.bf16.mxu0 0
  %271 = vmatpush1.bf16.msra.mxu0 %v254
  %272 = vmatprep.subr.bf16.mxu0 0
  %273 = vmatpush1.bf16.msra.mxu0 %v255
  %274 = vmatprep.subr.bf16.mxu0 0
  %275 = vmatpush1.bf16.msra.mxu0 %v256
  %276 = vmatprep.subr.bf16.mxu0 0
  %277 = vmatpush1.bf16.msra.mxu0 0
  %278 = vmatprep.subr.bf16.mxu0 0
  %279 = vmatpush1.bf16.msra.mxu0 0
  %280 = vmatprep.subr.bf16.mxu0 0
  %281 = vmatpush1.bf16.msra.mxu0 0
  %282 = vmatprep.subr.bf16.mxu0 0
  %283 = vmatpush1.bf16.msra.mxu0 0
  %284 = vmatprep.subr.bf16.mxu0 0
  %285 = vmatpush1.bf16.msra.mxu0 0
  %286 = vmatprep.subr.bf16.mxu0 0
  %287 = vmatpush1.bf16.msra.mxu0 0
  %288 = vmatprep.subr.bf16.mxu0 0
  %289 = vmatpush1.bf16.msra.mxu0 0
  %290 = vmatprep.subr.bf16.mxu0 0
  %291 = vmatpush1.bf16.msra.mxu0 0
  %292 = vmatprep.subr.bf16.mxu0 0
  %293 = vmatpush1.bf16.msra.mxu0 0
  %294 = vmatprep.subr.bf16.mxu0 0
  %295 = vmatpush1.bf16.msra.mxu0 0
  %296 = vmatprep.subr.bf16.mxu0 0
  %297 = vmatpush1.bf16.msra.mxu0 0
  %298 = vmatprep.subr.bf16.mxu0 0
  %299 = vmatpush1.bf16.msra.mxu0 0
  %300 = vmatprep.mubr.bf16.mxu0 0
  %301 = vmatmul.mubr.bf16.gmra.mrb[0].mxu0 %v263
  %v302 = vpop.f32.mrb[0].mxu0
  %v303 = vadd.f32 %v236, %v302
  %v304 = vpop.f32.mrb[0].mxu0
  %v305 = vpop.f32.mrb[0].mxu0
  %v306 = vadd.f32 %v236, %v305
  %v307 = vpop.f32.mrb[0].mxu0
  %308 = vmatprep.mubr.bf16.mxu0 0
  %309 = vmatmul.mubr.bf16.gmra.mrb[0].mxu0 %v266
  %v310 = vpop.f32.mrb[0].mxu0
  %v311 = vadd.f32 %v236, %v310
  %v312 = vpop.f32.mrb[0].mxu0
  %v313 = vpop.f32.mrb[0].mxu0
  %v314 = vpop.f32.mrb[0].mxu0
  %315 = vdwg.mxu0
  %v316 = vlaneseq
  %v317 = vand.u32 %v316, 127
  %vm318 = vcmp.eq.s32.totalorder %v317, 0
  %v319 = vxor.u32 %v303, 2147483648
  %v320 = vxor.u32 %v306, 2147483648
  %v321 = vxor.u32 %v311, 2147483648
  %v322 = vmul.f32 %v319, 1.442695
  %v323 = vpow.pop %v322
  %v324 = vmul.f32 %v320, 1.442695
  %v325 = vpow.pop %v324
  %v326 = vmul.f32 %v321, 1.442695
  %v327 = vpow.pop %v326
  %v328 = vadd.f32 %v323, 1.0
  %v329 = vadd.f32 %v325, 1.0
  %v330 = vadd.f32 %v327, 1.0
  %v331 = vrcp.pop %v328
  %v332 = vmul.f32 1.0, %v331
  %v333 = vrcp.pop %v329
  %v334 = vmul.f32 1.0, %v333
  %v335 = vrcp.pop %v330
  %v336 = vmul.f32 1.0, %v335
  %vm337 = vcmp.eq.s32.totalorder %v317, 1
  %v338 = vtanh.pop %v303
  %v339 = vtanh.pop %v306
  %v340 = vtanh.pop %v311
  %v341 = vsel %vm337, %v338, %v303
  %v342 = vsel %vm337, %v339, %v306
  %v343 = vsel %vm337, %v340, %v311
  %v344 = vsel %vm318, %v332, %v341
  %v345 = vsel %vm318, %v334, %v342
  %v346 = vsel %vm318, %v336, %v343
  %vm347 = vcmask 31744
  %348 = vst.msk [vmem:[%s6] sm:$0xff] %vm347, %v344
  %349 = vst.msk [vmem:[%s6 + $0x8] sm:$0xff] %vm347, %v345
  %350 = vst.msk [vmem:[%s6 + $0x10] sm:$0xff] %vm347, %v346
  %v351 = vld [vmem:[%s5] sm:$0xff]
  %v352 = vld [vmem:[%s5 + $0x8] sm:$0xff]
  %v353 = vld [vmem:[%s5 + $0x10] sm:$0xff]
  %v354 = vmul.f32 %v351, 0.5
  %v355 = vmul.f32 %v352, 0.5
  %v356 = vmul.f32 %v353, 0.5
  %v357 = vadd.f32 %v344, %v354
  %v358 = vadd.f32 %v345, %v355
  %v359 = vadd.f32 %v346, %v356
  %360 = vst.msk [vmem:[%s7] sm:$0xff] %vm347, %v357
  %361 = vst.msk [vmem:[%s7 + $0x8] sm:$0xff] %vm347, %v358
  %362 = vst.msk [vmem:[%s7 + $0x10] sm:$0xff] %vm347, %v359
  // Predicated region
  $region26: #{_lambda_.1} parent=0 // pred_check
    _
  $region27: #{_lambda_.1} parent=0 // pred_check_branch
    %364 = sbr.rel (0) target = $region29
  $region28: #{_lambda_.1} parent=0 // pred_region
    _
  $region29: #{_lambda_.1} parent=0 // pred_fallthru
    _
  // Predicated region
  $region30: #{_lambda_.1} parent=0 // pred_check
    _
  $region31: #{_lambda_.1} parent=0 // pred_check_branch
    %366 = sbr.rel (0) target = $region33
  $region32: #{_lambda_.1} parent=0 // pred_region
    _
  $region33: #{_lambda_.1} parent=0 // pred_fallthru
    _
  // Predicated region
  $region34: #{_lambda_.1} parent=0 // pred_check
    _
  $region35: #{_lambda_.1} parent=0 // pred_check_branch
    %368 = sbr.rel (0) target = $region37
  $region36: #{_lambda_.1} parent=0 // pred_region
    _
  $region37: #{_lambda_.1} parent=0 // pred_fallthru
    _
  // Predicated region
  $region38: #{_lambda_.1} parent=0 // pred_check
    _
  $region39: #{_lambda_.1} parent=0 // pred_check_branch
    %370 = sbr.rel (0) target = $region41
  $region40: #{_lambda_.1} parent=0 // pred_region
    _
  $region41: #{_lambda_.1} parent=0 // pred_fallthru
    _

</llo_original>
